<compile_context>
chip_gen: v5e
topology: v5e:2x2
jax: 0.10.0
libtpu: 0.0.40
codegen_flags: <defaults>
</compile_context>

<pallas_src>
import functools

import jax
import jax.numpy as jnp
from jax import lax
from jax.experimental import pallas as pl
from jax.experimental.pallas import tpu as pltpu


def _round_up(x, m):
    return (x + m - 1) // m * m


# ----------------------------------------------------------------------------
# Pallas kernel: one (tm, tn) output tile of a stride-1 "valid" conv in
# flat-shift form with kw folded into the contraction:
#     out[m, :] = act( sum_i  X2[m + i*Wp_a, :] @ Wf[i]  + b )
# X2 (rows, kw*Cin_p) is VMEM-resident; the kh-tap loop is an unrolled Python
# loop, each tap a bf16 MXU matmul accumulated in an f32 vreg value.
# ----------------------------------------------------------------------------
def _conv_kernel(x_ref, w_ref, b_ref, o_ref, *, row_shifts, tm, act):
    m0 = pl.program_id(1) * tm
    acc = None
    for t, shift in enumerate(row_shifts):
        start = pl.multiple_of(m0 + shift, 8)      # tm and shifts are 8-aligned
        a = x_ref[pl.ds(start, tm), :]             # (tm, kw*Cin_p) bf16
        p = jnp.dot(a, w_ref[t], preferred_element_type=jnp.float32)
        acc = p if acc is None else acc + p
    y = acc + b_ref[...]                           # (1, tn) bias broadcast
    if act == "relu":
        y = jnp.maximum(y, 0.0)
    elif act == "sigmoid":
        y = jax.nn.sigmoid(y)
    o_ref[...] = y.astype(o_ref.dtype)


def conv2d_stride1(xp, w, b, act="none", out_dtype=jnp.bfloat16):
    """Stride-1 'valid' conv of an already zero-padded NHWC input.

    xp: (N, Hp, Wp, Cin), w: (kh, kw, Cin, Cout), b: (Cout,)
    returns (N, Hp-kh+1, Wp-kw+1, Cout) in out_dtype.
    """
    n, hp, wp, c = xp.shape
    kh, kw, _, cout = w.shape
    ho, wo = hp - kh + 1, wp - kw + 1

    c_p = _round_up(c, 8)
    cout_p = _round_up(cout, 8) if cout <= 128 else _round_up(cout, 128)
    tn = cout_p if cout_p <= 128 else 128
    wp_a = _round_up(wp, 8)                        # aligned tap shifts

    m = n * hp * wp_a
    nb = -(-m // 256)                              # number of M tiles
    tm = _round_up(-(-m // nb), 8)                 # <=256, multiple of 8
    mp = nb * tm
    halo = (kh - 1) * wp_a
    rows = mp + halo
    need = rows + (kw - 1)

    # XLA-side prep: bf16 cast, width/channel pad, kw-fold (lane-axis concat of
    # kw shifted copies).  O(kw * activation) and tiny at these sizes.
    xb = jnp.pad(xp.astype(jnp.bfloat16),
                 ((0, 0), (0, 0), (0, wp_a - wp), (0, c_p - c)))
    flat = xb.reshape(n * hp * wp_a, c_p)
    flat = jnp.pad(flat, ((0, need - flat.shape[0]), (0, 0)))
    x2 = jnp.concatenate([flat[j:j + rows] for j in range(kw)], axis=1)

    wf = jnp.pad(w.astype(jnp.bfloat16),
                 ((0, 0), (0, 0), (0, c_p - c), (0, cout_p - cout)))
    wf = wf.reshape(kh, kw * c_p, cout_p)
    bf = jnp.pad(b.astype(jnp.float32).reshape(1, cout),
                 ((0, 0), (0, cout_p - cout)))

    row_shifts = tuple(i * wp_a for i in range(kh))

    out = pl.pallas_call(
        functools.partial(_conv_kernel, row_shifts=row_shifts, tm=tm, act=act),
        out_shape=jax.ShapeDtypeStruct((mp, cout_p), out_dtype),
        # ci outer so the weight block stays resident across the mi sweep.
        grid=(cout_p // tn, mp // tm),
        in_specs=[
            pl.BlockSpec((rows, kw * c_p), lambda ci, mi: (0, 0)),
            pl.BlockSpec((kh, kw * c_p, tn), lambda ci, mi: (0, 0, ci)),
            pl.BlockSpec((1, tn), lambda ci, mi: (0, ci)),
        ],
        out_specs=pl.BlockSpec((tm, tn), lambda ci, mi: (mi, ci)),
        compiler_params=pltpu.CompilerParams(
            dimension_semantics=("parallel", "parallel")),
    )(x2, wf, bf)

    out = out[:m, :cout].reshape(n, hp, wp_a, cout)
    return out[:, :ho, :wo, :]


# ----------------------------------------------------------------------------
# Layer wrappers (NHWC activations, PyTorch weight layouts).
# ----------------------------------------------------------------------------
def conv2d(x, w_oihw, b, stride=1, pad_lrtb=(0, 0, 0, 0), act="none",
           out_dtype=jnp.bfloat16):
    """PyTorch ZeroPad2d(pad_lrtb) + Conv2d(padding=0) (+ fused activation)."""
    left, right, top, bottom = pad_lrtb
    xp = jnp.pad(x, ((0, 0), (top, bottom), (left, right), (0, 0)))
    w = jnp.transpose(w_oihw, (2, 3, 1, 0))        # (kh, kw, Cin, Cout)
    kh, kw, cin, cout = w.shape
    if stride == 1:
        return conv2d_stride1(xp, w, b, act=act, out_dtype=out_dtype)
    assert stride == 2
    n, hp, wpx, _ = xp.shape
    ho = (hp - kh) // 2 + 1
    wo = (wpx - kw) // 2 + 1
    # Space-to-depth: stride-2 conv == stride-1 ceil(k/2) conv over the 4
    # phase planes stacked on channels (phase-padded kernel).
    hp2, wp2 = _round_up(hp, 2), _round_up(wpx, 2)
    xe = jnp.pad(xp, ((0, 0), (0, hp2 - hp), (0, wp2 - wpx), (0, 0)))
    xs = xe.reshape(n, hp2 // 2, 2, wp2 // 2, 2, cin)
    xs = xs.transpose(0, 1, 3, 2, 4, 5).reshape(n, hp2 // 2, wp2 // 2, 4 * cin)
    kh2, kw2 = (kh + 1) // 2, (kw + 1) // 2
    ws = jnp.zeros((kh2, kw2, 2, 2, cin, cout), w.dtype)
    for pi in range(2):
        for pj in range(2):
            sub = w[pi::2, pj::2]                  # taps with i%2==pi, j%2==pj
            ws = ws.at[:sub.shape[0], :sub.shape[1], pi, pj].set(sub)
    ws = ws.reshape(kh2, kw2, 4 * cin, cout)
    y = conv2d_stride1(xs, ws, b, act=act, out_dtype=out_dtype)
    return y[:, :ho, :wo, :]


def conv_transpose2d(x, w_iohw, b, stride=1, act="none", out_dtype=jnp.bfloat16):
    """PyTorch ConvTranspose2d (padding=0, output_padding=0), fused activation."""
    cin, cout, kh, kw = w_iohw.shape
    if stride == 1:
        xp = jnp.pad(x, ((0, 0), (kh - 1, kh - 1), (kw - 1, kw - 1), (0, 0)))
        wf = jnp.transpose(w_iohw[:, :, ::-1, ::-1], (2, 3, 0, 1))
        return conv2d_stride1(xp, wf, b, act=act, out_dtype=out_dtype)
    assert stride == 2
    n, hi, wi, _ = x.shape
    t = (kh + 1) // 2
    hout, wout = (hi - 1) * 2 + kh, (wi - 1) * 2 + kw
    # Subpixel decomposition: one stride-1 (t x t) conv produces all 4 output
    # phases packed on the channel axis, then a cheap depth-to-space.
    xp = jnp.pad(x, ((0, 0), (t - 1, t - 1), (t - 1, t - 1), (0, 0)))
    wpk = jnp.zeros((t, t, cin, 2, 2, cout), w_iohw.dtype)
    for a in range(t):
        for bb in range(t):
            for rh in range(2):
                for rw in range(2):
                    ih = 2 * (t - 1 - a) + rh
                    iw = 2 * (t - 1 - bb) + rw
                    if ih < kh and iw < kw:
                        wpk = wpk.at[a, bb, :, rh, rw, :].set(w_iohw[:, :, ih, iw])
    wpk = wpk.reshape(t, t, cin, 4 * cout)
    y = conv2d_stride1(xp, wpk, jnp.tile(b, 4), act=act, out_dtype=out_dtype)
    hq, wq = y.shape[1], y.shape[2]                # = hi + t - 1, wi + t - 1
    y = y.reshape(n, hq, wq, 2, 2, cout).transpose(0, 1, 3, 2, 4, 5)
    y = y.reshape(n, 2 * hq, 2 * wq, cout)
    return y[:, :hout, :wout, :]


# ----------------------------------------------------------------------------
# Model forward (eval mode: Dropout = identity).
# ----------------------------------------------------------------------------
def autoencoder_drop_forward(x_nchw, params):
    bf16 = jnp.bfloat16
    x = jnp.transpose(x_nchw, (0, 2, 3, 1))                                   # NHWC
    # ----- encoder -----
    h = conv2d(x, *params["enc1"], stride=2, pad_lrtb=(1, 2, 1, 2), act="relu", out_dtype=bf16)
    h = conv2d(h, *params["enc2"], stride=2, pad_lrtb=(1, 2, 1, 2), act="relu", out_dtype=bf16)
    h = conv2d(h, *params["enc3"], stride=2, pad_lrtb=(1, 2, 1, 2), act="relu", out_dtype=bf16)
    h = conv2d(h, *params["enc4"], stride=2, act="relu", out_dtype=bf16)
    h = conv2d(h, *params["enc5"], stride=2, act="relu", out_dtype=bf16)
    z = conv2d(h, *params["enc6"], stride=1, act="none", out_dtype=bf16)      # encoder_output_activation=None
    # ----- decoder -----
    h = conv_transpose2d(z, *params["fc_d"], stride=1, act="relu", out_dtype=bf16)
    h = conv_transpose2d(h, *params["conv5d"], stride=2, act="relu", out_dtype=bf16)
    h = conv_transpose2d(h, *params["conv4d"], stride=2, act="relu", out_dtype=bf16)
    h = conv_transpose2d(h, *params["conv3d"], stride=2, act="relu", out_dtype=bf16)[:, 1:-1, 1:-1, :]
    h = conv_transpose2d(h, *params["conv2d"], stride=2, act="relu", out_dtype=bf16)[:, 1:-1, 1:-1, :]
    # Sigmoid is elementwise -> fused into the kernel (commutes with the crop).
    h = conv_transpose2d(h, *params["conv1d"], stride=2, act="sigmoid",
                         out_dtype=jnp.float32)[:, 0:-1, 0:-1, :]
    return jnp.transpose(h, (0, 3, 1, 2))                                     # back to NCHW


# ----------------------------------------------------------------------------
# Pure-lax reference (same bf16-operand / f32-accumulate discipline) used to
# verify the Pallas forward end-to-end, plus per-path unit self-tests.
# ----------------------------------------------------------------------------
def _act(y, act):
    if act == "relu":
        return jnp.maximum(y, 0.0)
    if act == "sigmoid":
        return jax.nn.sigmoid(y)
    return y


def _ref_conv(x, w_oihw, b, stride, pad_lrtb, act, out_dtype):
    left, right, top, bottom = pad_lrtb
    xp = jnp.pad(x, ((0, 0), (top, bottom), (left, right), (0, 0))).astype(jnp.bfloat16)
    wf = jnp.transpose(w_oihw, (2, 3, 1, 0)).astype(jnp.bfloat16)
    y = lax.conv_general_dilated(xp, wf, (stride, stride), "VALID",
                                 dimension_numbers=("NHWC", "HWIO", "NHWC"),
                                 preferred_element_type=jnp.float32) + b
    return _act(y, act).astype(out_dtype)


def _ref_convT(x, w_iohw, b, stride, act, out_dtype):
    cin, cout, kh, kw = w_iohw.shape
    wf = jnp.transpose(w_iohw[:, :, ::-1, ::-1], (2, 3, 0, 1)).astype(jnp.bfloat16)
    y = lax.conv_general_dilated(x.astype(jnp.bfloat16), wf, (1, 1),
                                 padding=[(kh - 1, kh - 1), (kw - 1, kw - 1)],
                                 lhs_dilation=(stride, stride),
                                 dimension_numbers=("NHWC", "HWIO", "NHWC"),
                                 preferred_element_type=jnp.float32) + b
    return _act(y, act).astype(out_dtype)


def autoencoder_drop_forward_ref(x_nchw, params):
    bf16 = jnp.bfloat16
    x = jnp.transpose(x_nchw, (0, 2, 3, 1))
    h = _ref_conv(x, *params["enc1"], 2, (1, 2, 1, 2), "relu", bf16)
    h = _ref_conv(h, *params["enc2"], 2, (1, 2, 1, 2), "relu", bf16)
    h = _ref_conv(h, *params["enc3"], 2, (1, 2, 1, 2), "relu", bf16)
    h = _ref_conv(h, *params["enc4"], 2, (0, 0, 0, 0), "relu", bf16)
    h = _ref_conv(h, *params["enc5"], 2, (0, 0, 0, 0), "relu", bf16)
    z = _ref_conv(h, *params["enc6"], 1, (0, 0, 0, 0), "none", bf16)
    h = _ref_convT(z, *params["fc_d"], 1, "relu", bf16)
    h = _ref_convT(h, *params["conv5d"], 2, "relu", bf16)
    h = _ref_convT(h, *params["conv4d"], 2, "relu", bf16)
    h = _ref_convT(h, *params["conv3d"], 2, "relu", bf16)[:, 1:-1, 1:-1, :]
    h = _ref_convT(h, *params["conv2d"], 2, "relu", bf16)[:, 1:-1, 1:-1, :]
    h = _ref_convT(h, *params["conv1d"], 2, "none", jnp.float32)[:, 0:-1, 0:-1, :]
    h = jax.nn.sigmoid(h)
    return jnp.transpose(h, (0, 3, 1, 2))


def _selftest(key):
    k = jax.random.split(key, 9)
    # (a) stride-2 conv (space-to-depth path) with the module's asymmetric pad.
    x = jax.random.normal(k[0], (2, 13, 15, 6), jnp.float32) * 0.1
    w = jax.random.normal(k[1], (8, 6, 5, 5), jnp.float32) * 0.1          # OIHW
    b = jax.random.normal(k[2], (8,), jnp.float32) * 0.1
    got = conv2d(x, w, b, stride=2, pad_lrtb=(1, 2, 1, 2), act="none",
                 out_dtype=jnp.float32)
    ref = _ref_conv(x, w, b, 2, (1, 2, 1, 2), "none", jnp.float32)
    assert got.shape == ref.shape, (got.shape, ref.shape)
    err = float(jnp.max(jnp.abs(got - ref)))
    assert err < 2e-2, f"stride-2 conv selftest err={err}"

    # (b) stride-2 ConvTranspose (subpixel path), kernels 3 and 5.
    for i, (kk, cin, cout) in enumerate(((3, 5, 7), (5, 6, 4))):
        xk = jax.random.normal(k[3 + 2 * i], (2, 6, 7, cin), jnp.float32) * 0.1
        wk = jax.random.normal(k[4 + 2 * i], (cin, cout, kk, kk), jnp.float32) * 0.1
        bk = jnp.linspace(-0.1, 0.1, cout).astype(jnp.float32)
        got = conv_transpose2d(xk, wk, bk, stride=2, act="none",
                               out_dtype=jnp.float32)
        ref = _ref_convT(xk, wk, bk, 2, "none", jnp.float32)
        assert got.shape == ref.shape, (got.shape, ref.shape)
        err = float(jnp.max(jnp.abs(got - ref)))
        assert err < 2e-2, f"stride-2 convT k={kk} selftest err={err}"


# ----------------------------------------------------------------------------
# Deterministic parameter init (PyTorch-style uniform bounds, PyTorch layouts).
# ----------------------------------------------------------------------------
def _init_conv(key, cout, cin, kh, kw):
    k1, k2 = jax.random.split(key)
    bound = 1.0 / (cin * kh * kw) ** 0.5
    w = jax.random.uniform(k1, (cout, cin, kh, kw), jnp.float32, -bound, bound)
    b = jax.random.uniform(k2, (cout,), jnp.float32, -bound, bound)
    return w, b


def _init_convT(key, cin, cout, kh, kw):
    k1, k2 = jax.random.split(key)
    bound = 1.0 / (cout * kh * kw) ** 0.5
    w = jax.random.uniform(k1, (cin, cout, kh, kw), jnp.float32, -bound, bound)
    b = jax.random.uniform(k2, (cout,), jnp.float32, -bound, bound)
    return w, b


if __name__ == "__main__":
    key = jax.random.PRNGKey(0)
    keys = jax.random.split(key, 14)

    _selftest(keys[13])

    # z_dim is a constructor parameter of AutoEncoderDrop; small value here.
    z_dim = 64
    params = {
        "enc1":   _init_conv(keys[0], 32, 1, 5, 5),
        "enc2":   _init_conv(keys[1], 64, 32, 5, 5),
        "enc3":   _init_conv(keys[2], 128, 64, 5, 5),
        "enc4":   _init_conv(keys[3], 256, 128, 3, 3),
        "enc5":   _init_conv(keys[4], 512, 256, 3, 3),
        "enc6":   _init_conv(keys[5], z_dim, 512, 3, 3),
        "fc_d":   _init_convT(keys[6], z_dim, 512, 3, 3),
        "conv5d": _init_convT(keys[7], 512, 256, 3, 3),
        "conv4d": _init_convT(keys[8], 256, 128, 3, 3),
        "conv3d": _init_convT(keys[9], 128, 64, 5, 5),
        "conv2d": _init_convT(keys[10], 64, 32, 5, 5),
        "conv1d": _init_convT(keys[11], 32, 1, 5, 5),
    }

    # Encoder/decoder shapes close exactly at 128x128 input
    # (128 -> 64 -> 32 -> 16 -> 7 -> 3 -> 1, then 1 -> 3 -> 7 -> 15 -> 31 -> 63 -> 128).
    x = jax.random.uniform(keys[12], (2, 1, 128, 128), jnp.float32)

    fwd = jax.jit(autoencoder_drop_forward)
    y = jax.block_until_ready(fwd(x, params))
    y_ref = jax.block_until_ready(jax.jit(autoencoder_drop_forward_ref)(x, params))

    assert y.shape == (2, 1, 128, 128), y.shape
    assert bool(jnp.all(jnp.isfinite(y)))
    assert bool(jnp.all((y >= 0.0) & (y <= 1.0)))          # sigmoid output range
    err = float(jnp.max(jnp.abs(y - y_ref)))
    assert err < 5e-2, f"end-to-end mismatch vs lax reference: {err}"
    print("KERNEL_OK")
</pallas_src>

<mosaic_0001>
module attributes {stable_mosaic.version = 11 : i64} {
  func.func @_conv_kernel(%arg0: i32, %arg1: i32, %arg2: memref<288x72xbf16, #tpu.memory_space<vmem>>, %arg3: memref<3x72x8xbf16, #tpu.memory_space<vmem>>, %arg4: memref<1x8xf32, #tpu.memory_space<vmem>>, %arg5: memref<256x8xf32, #tpu.memory_space<vmem>>) attributes {dimension_semantics = [#tpu.dimension_semantics<parallel>, #tpu.dimension_semantics<parallel>], iteration_bounds = array<i64: 1, 1>, scalar_prefetch = 0 : i64, scratch_operands = 0 : i64, tpu.core_type = #tpu.core_type<tc>, window_params = [{pipeline_mode = #tpu.pipeline_mode<synchronous>, transform_indices = @transform_0, window_bounds = array<i64: 288, 72>}, {transform_indices = @transform_1, window_bounds = array<i64: 3, 72, 8>}, {transform_indices = @transform_2, window_bounds = array<i64: 1, 8>}, {transform_indices = @transform_3, window_bounds = array<i64: 256, 8>}]} {
    %c256_i32 = arith.constant 256 : i32
    %0 = arith.muli %arg1, %c256_i32 : i32
    %c0_i32 = arith.constant 0 : i32
    %1 = arith.addi %0, %c0_i32 : i32
    %2 = tpu.assume_multiple %1, 8 : i32
    %3 = arith.index_cast %2 : i32 to index
    %c0 = arith.constant 0 : index
    %4 = vector.load %arg2[%3, %c0] : memref<288x72xbf16, #tpu.memory_space<vmem>>, vector<256x72xbf16>
    %c0_0 = arith.constant 0 : index
    %c0_1 = arith.constant 0 : index
    %c0_2 = arith.constant 0 : index
    %5 = vector.load %arg3[%c0_0, %c0_1, %c0_2] : memref<3x72x8xbf16, #tpu.memory_space<vmem>>, vector<1x72x8xbf16>
    %6 = vector.shape_cast %5 : vector<1x72x8xbf16> to vector<72x8xbf16>
    %cst = arith.constant dense<0.000000e+00> : vector<256x8xf32>
    %7 = tpu.matmul %4, %6, %cst {dimension_numbers = #tpu.dot_dimension_numbers<[1], [0], [0], [1], [0, 0, 1, 1], [], []>} : vector<256x72xbf16>, vector<72x8xbf16>, vector<256x8xf32> -> vector<256x8xf32>
    %c16_i32 = arith.constant 16 : i32
    %8 = arith.addi %0, %c16_i32 : i32
    %9 = tpu.assume_multiple %8, 8 : i32
    %10 = arith.index_cast %9 : i32 to index
    %c0_3 = arith.constant 0 : index
    %11 = vector.load %arg2[%10, %c0_3] : memref<288x72xbf16, #tpu.memory_space<vmem>>, vector<256x72xbf16>
    %c1 = arith.constant 1 : index
    %c0_4 = arith.constant 0 : index
    %c0_5 = arith.constant 0 : index
    %12 = vector.load %arg3[%c1, %c0_4, %c0_5] : memref<3x72x8xbf16, #tpu.memory_space<vmem>>, vector<1x72x8xbf16>
    %13 = vector.shape_cast %12 : vector<1x72x8xbf16> to vector<72x8xbf16>
    %cst_6 = arith.constant dense<0.000000e+00> : vector<256x8xf32>
    %14 = tpu.matmul %11, %13, %cst_6 {dimension_numbers = #tpu.dot_dimension_numbers<[1], [0], [0], [1], [0, 0, 1, 1], [], []>} : vector<256x72xbf16>, vector<72x8xbf16>, vector<256x8xf32> -> vector<256x8xf32>
    %15 = arith.addf %7, %14 : vector<256x8xf32>
    %c32_i32 = arith.constant 32 : i32
    %16 = arith.addi %0, %c32_i32 : i32
    %17 = tpu.assume_multiple %16, 8 : i32
    %18 = arith.index_cast %17 : i32 to index
    %c0_7 = arith.constant 0 : index
    %19 = vector.load %arg2[%18, %c0_7] : memref<288x72xbf16, #tpu.memory_space<vmem>>, vector<256x72xbf16>
    %c2 = arith.constant 2 : index
    %c0_8 = arith.constant 0 : index
    %c0_9 = arith.constant 0 : index
    %20 = vector.load %arg3[%c2, %c0_8, %c0_9] : memref<3x72x8xbf16, #tpu.memory_space<vmem>>, vector<1x72x8xbf16>
    %21 = vector.shape_cast %20 : vector<1x72x8xbf16> to vector<72x8xbf16>
    %cst_10 = arith.constant dense<0.000000e+00> : vector<256x8xf32>
    %22 = tpu.matmul %19, %21, %cst_10 {dimension_numbers = #tpu.dot_dimension_numbers<[1], [0], [0], [1], [0, 0, 1, 1], [], []>} : vector<256x72xbf16>, vector<72x8xbf16>, vector<256x8xf32> -> vector<256x8xf32>
    %23 = arith.addf %15, %22 : vector<256x8xf32>
    %c0_11 = arith.constant 0 : index
    %c0_12 = arith.constant 0 : index
    %24 = vector.load %arg4[%c0_11, %c0_12] : memref<1x8xf32, #tpu.memory_space<vmem>>, vector<1x8xf32>
    %25 = vector.broadcast %24 : vector<1x8xf32> to vector<256x8xf32>
    %26 = arith.addf %23, %25 : vector<256x8xf32>
    %c0_13 = arith.constant 0 : index
    %c0_14 = arith.constant 0 : index
    %27 = vector.load %arg5[%c0_13, %c0_14] : memref<256x8xf32, #tpu.memory_space<vmem>>, vector<256x8xf32>
    tpu.vector_store %arg5[%c0_13, %c0_14], %26 {strides = array<i32>} : memref<256x8xf32, #tpu.memory_space<vmem>>, vector<256x8xf32>,
    return
  }
  func.func @transform_0(%arg0: i32, %arg1: i32) -> (i32, i32) {
    %c0_i32 = arith.constant 0 : i32
    %c0_i32_0 = arith.constant 0 : i32
    %c0_i32_1 = arith.constant 0 : i32
    return %c0_i32, %c0_i32_0 : i32, i32
  }
  func.func @transform_1(%arg0: i32, %arg1: i32) -> (i32, i32, i32) {
    %c0_i32 = arith.constant 0 : i32
    %c0_i32_0 = arith.constant 0 : i32
    %c0_i32_1 = arith.constant 0 : i32
    return %c0_i32, %c0_i32_0, %arg0 : i32, i32, i32
  }
  func.func @transform_2(%arg0: i32, %arg1: i32) -> (i32, i32) {
    %c0_i32 = arith.constant 0 : i32
    %c0_i32_0 = arith.constant 0 : i32
    return %c0_i32, %arg0 : i32, i32
  }
  func.func @transform_3(%arg0: i32, %arg1: i32) -> (i32, i32) {
    %c0_i32 = arith.constant 0 : i32
    return %arg1, %arg0 : i32, i32
  }
}

</mosaic_0001>

<llo_original>
// kernel: tpu_custom_call.1
$region0: #{tpu_custom_call.1}
  #allocation0 [shape = 'u32[]', space=smem, size = 0x4, offset = 0x4, fixed_abs, tag = 'smem constant byte address 0x4 - core index']
  #allocation1 [shape = 'u32[72,128]{1,0:T(1,128)}', space=vmem, size = 0x9000, scoped, tag = 'internal scratch']
  %s0 = inlined_call_operand.vmem [shape: bf16[288,72], index: 0, kind: input, shape index: {}]
  %s1 = inlined_call_operand.vmem [shape: bf16[3,72,8], index: 1, kind: input, shape index: {}]
  %s2 = inlined_call_operand.vmem [shape: f32[1,8], index: 2, kind: input, shape index: {}]
  %s3 = inlined_call_operand.vmem [shape: f32[256,8], index: 3, kind: output, shape index: {}]
  %s4 = sld [smem:[#allocation0]]
  $region22: #{tpu_custom_call.1} parent=0
    _
  %s6 = ssub.s32 1, %s4
  %s7 = scalar_select 0, %s6, %s4
  // Predicated region
  $region2: #{tpu_custom_call.1} parent=0 // pred_check
    _
  $region3: #{tpu_custom_call.1} parent=0 // pred_check_branch
    %9 = sbr.rel (0) target = $region5
  $region4: #{tpu_custom_call.1} parent=0 // pred_region
    _
  $region5: #{tpu_custom_call.1} parent=0 // pred_fallthru
    _
  // Predicated region
  $region6: #{tpu_custom_call.1} parent=0 // pred_check
    _
  $region7: #{tpu_custom_call.1} parent=0 // pred_check_branch
    %11 = sbr.rel (0) target = $region9
  $region8: #{tpu_custom_call.1} parent=0 // pred_region
    _
  $region9: #{tpu_custom_call.1} parent=0 // pred_fallthru
    _
  // Predicated region
  $region10: #{tpu_custom_call.1} parent=0 // pred_check
    _
  $region11: #{tpu_custom_call.1} parent=0 // pred_check_branch
    %13 = sbr.rel (0) target = $region13
  $region12: #{tpu_custom_call.1} parent=0 // pred_region
    _
  $region13: #{tpu_custom_call.1} parent=0 // pred_fallthru
    _
  %s15 = smul.u32 0, 256
  %s16 = sshra.s32 %s15, 3
  %s17 = sand.u32 %s15, 7
  %s18 = smul.addr %s16, 4
  %s19 = scalar_lea.vmem %s0, %s18
  %v20 = vld [vmem:[%s19] sm:$0xf]
  %v21 = vld [vmem:[%s19 + $0x4] sm:$0xf]
  %v22 = vld [vmem:[%s19 + $0x8] sm:$0xf]
  %v23 = vld [vmem:[%s19 + $0xc] sm:$0xf]
  %v24 = vld [vmem:[%s19 + $0x10] sm:$0xf]
  %v25 = vld [vmem:[%s19 + $0x14] sm:$0xf]
  %v26 = vld [vmem:[%s19 + $0x18] sm:$0xf]
  %v27 = vld [vmem:[%s19 + $0x1c] sm:$0xf]
  %v28 = vld [vmem:[%s19 + $0x20] sm:$0xf]
  %v29 = vld [vmem:[%s19 + $0x24] sm:$0xf]
  %v30 = vld [vmem:[%s19 + $0x28] sm:$0xf]
  %v31 = vld [vmem:[%s19 + $0x2c] sm:$0xf]
  %v32 = vld [vmem:[%s19 + $0x30] sm:$0xf]
  %v33 = vld [vmem:[%s19 + $0x34] sm:$0xf]
  %v34 = vld [vmem:[%s19 + $0x38] sm:$0xf]
  %v35 = vld [vmem:[%s19 + $0x3c] sm:$0xf]
  %v36 = vld [vmem:[%s19 + $0x40] sm:$0xf]
  %v37 = vld [vmem:[%s19 + $0x44] sm:$0xf]
  %v38 = vld [vmem:[%s19 + $0x48] sm:$0xf]
  %v39 = vld [vmem:[%s19 + $0x4c] sm:$0xf]
  %v40 = vld [vmem:[%s19 + $0x50] sm:$0xf]
  %v41 = vld [vmem:[%s19 + $0x54] sm:$0xf]
  %v42 = vld [vmem:[%s19 + $0x58] sm:$0xf]
  %v43 = vld [vmem:[%s19 + $0x5c] sm:$0xf]
  %v44 = vld [vmem:[%s19 + $0x60] sm:$0xf]
  %v45 = vld [vmem:[%s19 + $0x64] sm:$0xf]
  %v46 = vld [vmem:[%s19 + $0x68] sm:$0xf]
  %v47 = vld [vmem:[%s19 + $0x6c] sm:$0xf]
  %v48 = vld [vmem:[%s19 + $0x70] sm:$0xf]
  %v49 = vld [vmem:[%s19 + $0x74] sm:$0xf]
  %v50 = vld [vmem:[%s19 + $0x78] sm:$0xf]
  %v51 = vld [vmem:[%s19 + $0x7c] sm:$0xf]
  %v52 = vld [vmem:[%s1] sm:$0xf]
  %v53 = vld [vmem:[%s1 + $0x4] sm:$0xf]
  %v54 = vld [vmem:[%s1 + $0x8] sm:$0xf]
  %v55 = vld [vmem:[%s1 + $0xc] sm:$0xf]
  %v56 = vld [vmem:[%s1 + $0x10] sm:$0xf]
  %v57 = vld [vmem:[%s1 + $0x14] sm:$0xf]
  %v58 = vld [vmem:[%s1 + $0x18] sm:$0xf]
  %v59 = vld [vmem:[%s1 + $0x1c] sm:$0xf]
  %v60 = vld [vmem:[%s1 + $0x20] sm:$0xf]
  %s61 = sadd.s32 %s15, 16
  %s62 = sshra.s32 %s61, 3
  %s63 = sand.u32 %s61, 7
  %s64 = smul.addr %s62, 4
  %s65 = scalar_lea.vmem %s0, %s64
  %v66 = vld [vmem:[%s65] sm:$0xf]
  %v67 = vld [vmem:[%s65 + $0x4] sm:$0xf]
  %v68 = vld [vmem:[%s65 + $0x8] sm:$0xf]
  %v69 = vld [vmem:[%s65 + $0xc] sm:$0xf]
  %v70 = vld [vmem:[%s65 + $0x10] sm:$0xf]
  %v71 = vld [vmem:[%s65 + $0x14] sm:$0xf]
  %v72 = vld [vmem:[%s65 + $0x18] sm:$0xf]
  %v73 = vld [vmem:[%s65 + $0x1c] sm:$0xf]
  %v74 = vld [vmem:[%s65 + $0x20] sm:$0xf]
  %v75 = vld [vmem:[%s65 + $0x24] sm:$0xf]
  %v76 = vld [vmem:[%s65 + $0x28] sm:$0xf]
  %v77 = vld [vmem:[%s65 + $0x2c] sm:$0xf]
  %v78 = vld [vmem:[%s65 + $0x30] sm:$0xf]
  %v79 = vld [vmem:[%s65 + $0x34] sm:$0xf]
  %v80 = vld [vmem:[%s65 + $0x38] sm:$0xf]
  %v81 = vld [vmem:[%s65 + $0x3c] sm:$0xf]
  %v82 = vld [vmem:[%s65 + $0x40] sm:$0xf]
  %v83 = vld [vmem:[%s65 + $0x44] sm:$0xf]
  %v84 = vld [vmem:[%s65 + $0x48] sm:$0xf]
  %v85 = vld [vmem:[%s65 + $0x4c] sm:$0xf]
  %v86 = vld [vmem:[%s65 + $0x50] sm:$0xf]
  %v87 = vld [vmem:[%s65 + $0x54] sm:$0xf]
  %v88 = vld [vmem:[%s65 + $0x58] sm:$0xf]
  %v89 = vld [vmem:[%s65 + $0x5c] sm:$0xf]
  %v90 = vld [vmem:[%s65 + $0x60] sm:$0xf]
  %v91 = vld [vmem:[%s65 + $0x64] sm:$0xf]
  %v92 = vld [vmem:[%s65 + $0x68] sm:$0xf]
  %v93 = vld [vmem:[%s65 + $0x6c] sm:$0xf]
  %v94 = vld [vmem:[%s65 + $0x70] sm:$0xf]
  %v95 = vld [vmem:[%s65 + $0x74] sm:$0xf]
  %v96 = vld [vmem:[%s65 + $0x78] sm:$0xf]
  %v97 = vld [vmem:[%s65 + $0x7c] sm:$0xf]
  %s98 = scalar_lea.vmem %s1, 36
  %v99 = vld [vmem:[%s98] sm:$0xf]
  %v100 = vld [vmem:[%s98 + $0x4] sm:$0xf]
  %v101 = vld [vmem:[%s98 + $0x8] sm:$0xf]
  %v102 = vld [vmem:[%s98 + $0xc] sm:$0xf]
  %v103 = vld [vmem:[%s98 + $0x10] sm:$0xf]
  %v104 = vld [vmem:[%s98 + $0x14] sm:$0xf]
  %v105 = vld [vmem:[%s98 + $0x18] sm:$0xf]
  %v106 = vld [vmem:[%s98 + $0x1c] sm:$0xf]
  %v107 = vld [vmem:[%s98 + $0x20] sm:$0xf]
  %v140 = vunpack.c.l.b16 %v66
  %v141 = vunpack.c.l.b16 %v67
  %v142 = vunpack.c.l.b16 %v68
  %v143 = vunpack.c.l.b16 %v69
  %v144 = vunpack.c.l.b16 %v70
  %v145 = vunpack.c.l.b16 %v71
  %v146 = vunpack.c.l.b16 %v72
  %v147 = vunpack.c.l.b16 %v73
  %v148 = vunpack.c.l.b16 %v74
  %v149 = vunpack.c.l.b16 %v75
  %v150 = vunpack.c.l.b16 %v76
  %v151 = vunpack.c.l.b16 %v77
  %v152 = vunpack.c.l.b16 %v78
  %v153 = vunpack.c.l.b16 %v79
  %v154 = vunpack.c.l.b16 %v80
  %v155 = vunpack.c.l.b16 %v81
  %v156 = vunpack.c.l.b16 %v82
  %v157 = vunpack.c.l.b16 %v83
  %v158 = vunpack.c.l.b16 %v84
  %v159 = vunpack.c.l.b16 %v85
  %v160 = vunpack.c.l.b16 %v86
  %v161 = vunpack.c.l.b16 %v87
  %v162 = vunpack.c.l.b16 %v88
  %v163 = vunpack.c.l.b16 %v89
  %v164 = vunpack.c.l.b16 %v90
  %v165 = vunpack.c.l.b16 %v91
  %v166 = vunpack.c.l.b16 %v92
  %v167 = vunpack.c.l.b16 %v93
  %v168 = vunpack.c.l.b16 %v94
  %v169 = vunpack.c.l.b16 %v95
  %v170 = vunpack.c.l.b16 %v96
  %v171 = vunpack.c.l.b16 %v97
  %v172 = vpack.c.b16 %v141, %v140
  %v173 = vpack.c.b16 %v143, %v142
  %v174 = vpack.c.b16 %v145, %v144
  %v175 = vpack.c.b16 %v147, %v146
  %v176 = vpack.c.b16 %v149, %v148
  %v177 = vpack.c.b16 %v151, %v150
  %v178 = vpack.c.b16 %v153, %v152
  %v179 = vpack.c.b16 %v155, %v154
  %v180 = vpack.c.b16 %v157, %v156
  %v181 = vpack.c.b16 %v159, %v158
  %v182 = vpack.c.b16 %v161, %v160
  %v183 = vpack.c.b16 %v163, %v162
  %v184 = vpack.c.b16 %v165, %v164
  %v185 = vpack.c.b16 %v167, %v166
  %v186 = vpack.c.b16 %v169, %v168
  %v187 = vpack.c.b16 %v171, %v170
  %v197 = vunpack.c.l.b16 %v99
  %v198 = vunpack.c.l.b16 %v100
  %v199 = vunpack.c.l.b16 %v101
  %v200 = vunpack.c.l.b16 %v102
  %v201 = vunpack.c.l.b16 %v103
  %v202 = vunpack.c.l.b16 %v104
  %v203 = vunpack.c.l.b16 %v105
  %v204 = vunpack.c.l.b16 %v106
  %v205 = vunpack.c.l.b16 %v107
  %v206 = vpack.c.b16 %v198, %v197
  %v207 = vpack.c.b16 %v200, %v199
  %v208 = vpack.c.b16 %v202, %v201
  %v209 = vpack.c.b16 %v204, %v203
  %v210 = vpack.c.b16 %v205, %v205
  %vm215 = vcmask 588800
  %v217 = vsel %vm215, %v172, 0
  %v220 = vsel %vm215, %v173, 0
  %v223 = vsel %vm215, %v174, 0
  %v226 = vsel %vm215, %v175, 0
  %v229 = vsel %vm215, %v176, 0
  %v232 = vsel %vm215, %v177, 0
  %v235 = vsel %vm215, %v178, 0
  %v238 = vsel %vm215, %v179, 0
  %v241 = vsel %vm215, %v180, 0
  %v244 = vsel %vm215, %v181, 0
  %v247 = vsel %vm215, %v182, 0
  %v250 = vsel %vm215, %v183, 0
  %v253 = vsel %vm215, %v184, 0
  %v256 = vsel %vm215, %v185, 0
  %v259 = vsel %vm215, %v186, 0
  %v262 = vsel %vm215, %v187, 0
  %vm264 = vcmask 1043456
  %v266 = vsel %vm264, %v210, 0
  %268 = vmatpush.bf16.msra.mxu0 0
  %269 = vmatpush.bf16.msra.mxu0 0
  %270 = vmatpush.bf16.msra.mxu0 0
  %271 = vmatpush.bf16.msra.mxu0 %v266
  %272 = vmatpush.bf16.msra.mxu0 %v209
  %273 = vmatpush.bf16.msra.mxu0 %v208
  %274 = vmatpush.bf16.msra.mxu0 %v207
  %275 = vmatpush.bf16.msra.mxu0 %v206
  %276 = vmatmul.bf16.gmra.mxu0 %v217
  %v277 = vpop.f32.mrf.mxu0
  %v278 = vadd.f32 0.0, %v277
  %v279 = vpop.f32.mrf.mxu0
  %v280 = vadd.f32 0.0, %v279
  %281 = vmatmul.bf16.gmra.mxu0 %v220
  %v282 = vpop.f32.mrf.mxu0
  %v283 = vadd.f32 0.0, %v282
  %v284 = vpop.f32.mrf.mxu0
  %v285 = vadd.f32 0.0, %v284
  %286 = vmatmul.bf16.gmra.mxu0 %v223
  %v287 = vpop.f32.mrf.mxu0
  %v288 = vadd.f32 0.0, %v287
  %v289 = vpop.f32.mrf.mxu0
  %v290 = vadd.f32 0.0, %v289
  %291 = vmatmul.bf16.gmra.mxu0 %v226
  %v292 = vpop.f32.mrf.mxu0
  %v293 = vadd.f32 0.0, %v292
  %v294 = vpop.f32.mrf.mxu0
  %v295 = vadd.f32 0.0, %v294
  %296 = vmatmul.bf16.gmra.mxu0 %v229
  %v297 = vpop.f32.mrf.mxu0
  %v298 = vadd.f32 0.0, %v297
  %v299 = vpop.f32.mrf.mxu0
  %v300 = vadd.f32 0.0, %v299
  %301 = vmatmul.bf16.gmra.mxu0 %v232
  %v302 = vpop.f32.mrf.mxu0
  %v303 = vadd.f32 0.0, %v302
  %v304 = vpop.f32.mrf.mxu0
  %v305 = vadd.f32 0.0, %v304
  %306 = vmatmul.bf16.gmra.mxu0 %v235
  %v307 = vpop.f32.mrf.mxu0
  %v308 = vadd.f32 0.0, %v307
  %v309 = vpop.f32.mrf.mxu0
  %v310 = vadd.f32 0.0, %v309
  %311 = vmatmul.bf16.gmra.mxu0 %v238
  %v312 = vpop.f32.mrf.mxu0
  %v313 = vadd.f32 0.0, %v312
  %v314 = vpop.f32.mrf.mxu0
  %v315 = vadd.f32 0.0, %v314
  %316 = vmatmul.bf16.gmra.mxu0 %v241
  %v317 = vpop.f32.mrf.mxu0
  %v318 = vadd.f32 0.0, %v317
  %v319 = vpop.f32.mrf.mxu0
  %v320 = vadd.f32 0.0, %v319
  %321 = vmatmul.bf16.gmra.mxu0 %v244
  %v322 = vpop.f32.mrf.mxu0
  %v323 = vadd.f32 0.0, %v322
  %v324 = vpop.f32.mrf.mxu0
  %v325 = vadd.f32 0.0, %v324
  %326 = vmatmul.bf16.gmra.mxu0 %v247
  %v327 = vpop.f32.mrf.mxu0
  %v328 = vadd.f32 0.0, %v327
  %v329 = vpop.f32.mrf.mxu0
  %v330 = vadd.f32 0.0, %v329
  %331 = vmatmul.bf16.gmra.mxu0 %v250
  %v332 = vpop.f32.mrf.mxu0
  %v333 = vadd.f32 0.0, %v332
  %v334 = vpop.f32.mrf.mxu0
  %v335 = vadd.f32 0.0, %v334
  %336 = vmatmul.bf16.gmra.mxu0 %v253
  %v337 = vpop.f32.mrf.mxu0
  %v338 = vadd.f32 0.0, %v337
  %v339 = vpop.f32.mrf.mxu0
  %v340 = vadd.f32 0.0, %v339
  %341 = vmatmul.bf16.gmra.mxu0 %v256
  %v342 = vpop.f32.mrf.mxu0
  %v343 = vadd.f32 0.0, %v342
  %v344 = vpop.f32.mrf.mxu0
  %v345 = vadd.f32 0.0, %v344
  %346 = vmatmul.bf16.gmra.mxu0 %v259
  %v347 = vpop.f32.mrf.mxu0
  %v348 = vadd.f32 0.0, %v347
  %v349 = vpop.f32.mrf.mxu0
  %v350 = vadd.f32 0.0, %v349
  %351 = vmatmul.bf16.gmra.mxu0 %v262
  %v352 = vpop.f32.mrf.mxu0
  %v353 = vadd.f32 0.0, %v352
  %v354 = vpop.f32.mrf.mxu0
  %v355 = vadd.f32 0.0, %v354
  %356 = vdwg.mxu0
  %v389 = vunpack.c.l.b16 %v20
  %v390 = vunpack.c.l.b16 %v21
  %v391 = vunpack.c.l.b16 %v22
  %v392 = vunpack.c.l.b16 %v23
  %v393 = vunpack.c.l.b16 %v24
  %v394 = vunpack.c.l.b16 %v25
  %v395 = vunpack.c.l.b16 %v26
  %v396 = vunpack.c.l.b16 %v27
  %v397 = vunpack.c.l.b16 %v28
  %v398 = vunpack.c.l.b16 %v29
  %v399 = vunpack.c.l.b16 %v30
  %v400 = vunpack.c.l.b16 %v31
  %v401 = vunpack.c.l.b16 %v32
  %v402 = vunpack.c.l.b16 %v33
  %v403 = vunpack.c.l.b16 %v34
  %v404 = vunpack.c.l.b16 %v35
  %v405 = vunpack.c.l.b16 %v36
  %v406 = vunpack.c.l.b16 %v37
  %v407 = vunpack.c.l.b16 %v38
  %v408 = vunpack.c.l.b16 %v39
  %v409 = vunpack.c.l.b16 %v40
  %v410 = vunpack.c.l.b16 %v41
  %v411 = vunpack.c.l.b16 %v42
  %v412 = vunpack.c.l.b16 %v43
  %v413 = vunpack.c.l.b16 %v44
  %v414 = vunpack.c.l.b16 %v45
  %v415 = vunpack.c.l.b16 %v46
  %v416 = vunpack.c.l.b16 %v47
  %v417 = vunpack.c.l.b16 %v48
  %v418 = vunpack.c.l.b16 %v49
  %v419 = vunpack.c.l.b16 %v50
  %v420 = vunpack.c.l.b16 %v51
  %v421 = vpack.c.b16 %v390, %v389
  %v422 = vpack.c.b16 %v392, %v391
  %v423 = vpack.c.b16 %v394, %v393
  %v424 = vpack.c.b16 %v396, %v395
  %v425 = vpack.c.b16 %v398, %v397
  %v426 = vpack.c.b16 %v400, %v399
  %v427 = vpack.c.b16 %v402, %v401
  %v428 = vpack.c.b16 %v404, %v403
  %v429 = vpack.c.b16 %v406, %v405
  %v430 = vpack.c.b16 %v408, %v407
  %v431 = vpack.c.b16 %v410, %v409
  %v432 = vpack.c.b16 %v412, %v411
  %v433 = vpack.c.b16 %v414, %v413
  %v434 = vpack.c.b16 %v416, %v415
  %v435 = vpack.c.b16 %v418, %v417
  %v436 = vpack.c.b16 %v420, %v419
  %v446 = vunpack.c.l.b16 %v52
  %v447 = vunpack.c.l.b16 %v53
  %v448 = vunpack.c.l.b16 %v54
  %v449 = vunpack.c.l.b16 %v55
  %v450 = vunpack.c.l.b16 %v56
  %v451 = vunpack.c.l.b16 %v57
  %v452 = vunpack.c.l.b16 %v58
  %v453 = vunpack.c.l.b16 %v59
  %v454 = vunpack.c.l.b16 %v60
  %v455 = vpack.c.b16 %v447, %v446
  %v456 = vpack.c.b16 %v449, %v448
  %v457 = vpack.c.b16 %v451, %v450
  %v458 = vpack.c.b16 %v453, %v452
  %v459 = vpack.c.b16 %v454, %v454
  %v465 = vsel %vm215, %v421, 0
  %v468 = vsel %vm215, %v422, 0
  %v471 = vsel %vm215, %v423, 0
  %v474 = vsel %vm215, %v424, 0
  %v477 = vsel %vm215, %v425, 0
  %v480 = vsel %vm215, %v426, 0
  %v483 = vsel %vm215, %v427, 0
  %v486 = vsel %vm215, %v428, 0
  %v489 = vsel %vm215, %v429, 0
  %v492 = vsel %vm215, %v430, 0
  %v495 = vsel %vm215, %v431, 0
  %v498 = vsel %vm215, %v432, 0
  %v501 = vsel %vm215, %v433, 0
  %v504 = vsel %vm215, %v434, 0
  %v507 = vsel %vm215, %v435, 0
  %v510 = vsel %vm215, %v436, 0
  %v513 = vsel %vm264, %v459, 0
  %515 = vmatpush.bf16.msra.mxu0 0
  %516 = vmatpush.bf16.msra.mxu0 0
  %517 = vmatpush.bf16.msra.mxu0 0
  %518 = vmatpush.bf16.msra.mxu0 %v513
  %519 = vmatpush.bf16.msra.mxu0 %v458
  %520 = vmatpush.bf16.msra.mxu0 %v457
  %521 = vmatpush.bf16.msra.mxu0 %v456
  %522 = vmatpush.bf16.msra.mxu0 %v455
  %523 = vmatmul.bf16.gmra.mxu0 %v465
  %v524 = vpop.f32.mrf.mxu0
  %v525 = vadd.f32 %v278, %v524
  %v526 = vpop.f32.mrf.mxu0
  %v527 = vadd.f32 %v280, %v526
  %528 = vmatmul.bf16.gmra.mxu0 %v468
  %v529 = vpop.f32.mrf.mxu0
  %v530 = vadd.f32 %v283, %v529
  %v531 = vpop.f32.mrf.mxu0
  %v532 = vadd.f32 %v285, %v531
  %533 = vmatmul.bf16.gmra.mxu0 %v471
  %v534 = vpop.f32.mrf.mxu0
  %v535 = vadd.f32 %v288, %v534
  %v536 = vpop.f32.mrf.mxu0
  %v537 = vadd.f32 %v290, %v536
  %538 = vmatmul.bf16.gmra.mxu0 %v474
  %v539 = vpop.f32.mrf.mxu0
  %v540 = vadd.f32 %v293, %v539
  %v541 = vpop.f32.mrf.mxu0
  %v542 = vadd.f32 %v295, %v541
  %543 = vmatmul.bf16.gmra.mxu0 %v477
  %v544 = vpop.f32.mrf.mxu0
  %v545 = vadd.f32 %v298, %v544
  %v546 = vpop.f32.mrf.mxu0
  %v547 = vadd.f32 %v300, %v546
  %548 = vmatmul.bf16.gmra.mxu0 %v480
  %v549 = vpop.f32.mrf.mxu0
  %v550 = vadd.f32 %v303, %v549
  %v551 = vpop.f32.mrf.mxu0
  %v552 = vadd.f32 %v305, %v551
  %553 = vmatmul.bf16.gmra.mxu0 %v483
  %v554 = vpop.f32.mrf.mxu0
  %v555 = vadd.f32 %v308, %v554
  %v556 = vpop.f32.mrf.mxu0
  %v557 = vadd.f32 %v310, %v556
  %558 = vmatmul.bf16.gmra.mxu0 %v486
  %v559 = vpop.f32.mrf.mxu0
  %v560 = vadd.f32 %v313, %v559
  %v561 = vpop.f32.mrf.mxu0
  %v562 = vadd.f32 %v315, %v561
  %563 = vmatmul.bf16.gmra.mxu0 %v489
  %v564 = vpop.f32.mrf.mxu0
  %v565 = vadd.f32 %v318, %v564
  %v566 = vpop.f32.mrf.mxu0
  %v567 = vadd.f32 %v320, %v566
  %568 = vmatmul.bf16.gmra.mxu0 %v492
  %v569 = vpop.f32.mrf.mxu0
  %v570 = vadd.f32 %v323, %v569
  %v571 = vpop.f32.mrf.mxu0
  %v572 = vadd.f32 %v325, %v571
  %573 = vmatmul.bf16.gmra.mxu0 %v495
  %v574 = vpop.f32.mrf.mxu0
  %v575 = vadd.f32 %v328, %v574
  %v576 = vpop.f32.mrf.mxu0
  %v577 = vadd.f32 %v330, %v576
  %578 = vmatmul.bf16.gmra.mxu0 %v498
  %v579 = vpop.f32.mrf.mxu0
  %v580 = vadd.f32 %v333, %v579
  %v581 = vpop.f32.mrf.mxu0
  %v582 = vadd.f32 %v335, %v581
  %583 = vmatmul.bf16.gmra.mxu0 %v501
  %v584 = vpop.f32.mrf.mxu0
  %v585 = vadd.f32 %v338, %v584
  %v586 = vpop.f32.mrf.mxu0
  %v587 = vadd.f32 %v340, %v586
  %588 = vmatmul.bf16.gmra.mxu0 %v504
  %v589 = vpop.f32.mrf.mxu0
  %v590 = vadd.f32 %v343, %v589
  %v591 = vpop.f32.mrf.mxu0
  %v592 = vadd.f32 %v345, %v591
  %593 = vmatmul.bf16.gmra.mxu0 %v507
  %v594 = vpop.f32.mrf.mxu0
  %v595 = vadd.f32 %v348, %v594
  %v596 = vpop.f32.mrf.mxu0
  %v597 = vadd.f32 %v350, %v596
  %598 = vmatmul.bf16.gmra.mxu0 %v510
  %v599 = vpop.f32.mrf.mxu0
  %v600 = vadd.f32 %v353, %v599
  %v601 = vpop.f32.mrf.mxu0
  %v602 = vadd.f32 %v355, %v601
  %603 = vdwg.mxu0
  %s604 = sadd.s32 %s15, 32
  %s605 = sshra.s32 %s604, 3
  %s606 = sand.u32 %s604, 7
  %s607 = smul.addr %s605, 4
  %s608 = scalar_lea.vmem %s0, %s607
  %v609 = vld [vmem:[%s608] sm:$0xf]
  %v610 = vld [vmem:[%s608 + $0x4] sm:$0xf]
  %v611 = vld [vmem:[%s608 + $0x8] sm:$0xf]
  %v612 = vld [vmem:[%s608 + $0xc] sm:$0xf]
  %v613 = vld [vmem:[%s608 + $0x10] sm:$0xf]
  %v614 = vld [vmem:[%s608 + $0x14] sm:$0xf]
  %v615 = vld [vmem:[%s608 + $0x18] sm:$0xf]
  %v616 = vld [vmem:[%s608 + $0x1c] sm:$0xf]
  %v617 = vld [vmem:[%s608 + $0x20] sm:$0xf]
  %v618 = vld [vmem:[%s608 + $0x24] sm:$0xf]
  %v619 = vld [vmem:[%s608 + $0x28] sm:$0xf]
  %v620 = vld [vmem:[%s608 + $0x2c] sm:$0xf]
  %v621 = vld [vmem:[%s608 + $0x30] sm:$0xf]
  %v622 = vld [vmem:[%s608 + $0x34] sm:$0xf]
  %v623 = vld [vmem:[%s608 + $0x38] sm:$0xf]
  %v624 = vld [vmem:[%s608 + $0x3c] sm:$0xf]
  %v625 = vld [vmem:[%s608 + $0x40] sm:$0xf]
  %v626 = vld [vmem:[%s608 + $0x44] sm:$0xf]
  %v627 = vld [vmem:[%s608 + $0x48] sm:$0xf]
  %v628 = vld [vmem:[%s608 + $0x4c] sm:$0xf]
  %v629 = vld [vmem:[%s608 + $0x50] sm:$0xf]
  %v630 = vld [vmem:[%s608 + $0x54] sm:$0xf]
  %v631 = vld [vmem:[%s608 + $0x58] sm:$0xf]
  %v632 = vld [vmem:[%s608 + $0x5c] sm:$0xf]
  %v633 = vld [vmem:[%s608 + $0x60] sm:$0xf]
  %v634 = vld [vmem:[%s608 + $0x64] sm:$0xf]
  %v635 = vld [vmem:[%s608 + $0x68] sm:$0xf]
  %v636 = vld [vmem:[%s608 + $0x6c] sm:$0xf]
  %v637 = vld [vmem:[%s608 + $0x70] sm:$0xf]
  %v638 = vld [vmem:[%s608 + $0x74] sm:$0xf]
  %v639 = vld [vmem:[%s608 + $0x78] sm:$0xf]
  %v640 = vld [vmem:[%s608 + $0x7c] sm:$0xf]
  %s641 = scalar_lea.vmem %s1, 72
  %v642 = vld [vmem:[%s641] sm:$0xf]
  %v643 = vld [vmem:[%s641 + $0x4] sm:$0xf]
  %v644 = vld [vmem:[%s641 + $0x8] sm:$0xf]
  %v645 = vld [vmem:[%s641 + $0xc] sm:$0xf]
  %v646 = vld [vmem:[%s641 + $0x10] sm:$0xf]
  %v647 = vld [vmem:[%s641 + $0x14] sm:$0xf]
  %v648 = vld [vmem:[%s641 + $0x18] sm:$0xf]
  %v649 = vld [vmem:[%s641 + $0x1c] sm:$0xf]
  %v650 = vld [vmem:[%s641 + $0x20] sm:$0xf]
  %v683 = vunpack.c.l.b16 %v609
  %v684 = vunpack.c.l.b16 %v610
  %v685 = vunpack.c.l.b16 %v611
  %v686 = vunpack.c.l.b16 %v612
  %v687 = vunpack.c.l.b16 %v613
  %v688 = vunpack.c.l.b16 %v614
  %v689 = vunpack.c.l.b16 %v615
  %v690 = vunpack.c.l.b16 %v616
  %v691 = vunpack.c.l.b16 %v617
  %v692 = vunpack.c.l.b16 %v618
  %v693 = vunpack.c.l.b16 %v619
  %v694 = vunpack.c.l.b16 %v620
  %v695 = vunpack.c.l.b16 %v621
  %v696 = vunpack.c.l.b16 %v622
  %v697 = vunpack.c.l.b16 %v623
  %v698 = vunpack.c.l.b16 %v624
  %v699 = vunpack.c.l.b16 %v625
  %v700 = vunpack.c.l.b16 %v626
  %v701 = vunpack.c.l.b16 %v627
  %v702 = vunpack.c.l.b16 %v628
  %v703 = vunpack.c.l.b16 %v629
  %v704 = vunpack.c.l.b16 %v630
  %v705 = vunpack.c.l.b16 %v631
  %v706 = vunpack.c.l.b16 %v632
  %v707 = vunpack.c.l.b16 %v633
  %v708 = vunpack.c.l.b16 %v634
  %v709 = vunpack.c.l.b16 %v635
  %v710 = vunpack.c.l.b16 %v636
  %v711 = vunpack.c.l.b16 %v637
  %v712 = vunpack.c.l.b16 %v638
  %v713 = vunpack.c.l.b16 %v639
  %v714 = vunpack.c.l.b16 %v640
  %v715 = vpack.c.b16 %v684, %v683
  %v716 = vpack.c.b16 %v686, %v685
  %v717 = vpack.c.b16 %v688, %v687
  %v718 = vpack.c.b16 %v690, %v689
  %v719 = vpack.c.b16 %v692, %v691
  %v720 = vpack.c.b16 %v694, %v693
  %v721 = vpack.c.b16 %v696, %v695
  %v722 = vpack.c.b16 %v698, %v697
  %v723 = vpack.c.b16 %v700, %v699
  %v724 = vpack.c.b16 %v702, %v701
  %v725 = vpack.c.b16 %v704, %v703
  %v726 = vpack.c.b16 %v706, %v705
  %v727 = vpack.c.b16 %v708, %v707
  %v728 = vpack.c.b16 %v710, %v709
  %v729 = vpack.c.b16 %v712, %v711
  %v730 = vpack.c.b16 %v714, %v713
  %v740 = vunpack.c.l.b16 %v642
  %v741 = vunpack.c.l.b16 %v643
  %v742 = vunpack.c.l.b16 %v644
  %v743 = vunpack.c.l.b16 %v645
  %v744 = vunpack.c.l.b16 %v646
  %v745 = vunpack.c.l.b16 %v647
  %v746 = vunpack.c.l.b16 %v648
  %v747 = vunpack.c.l.b16 %v649
  %v748 = vunpack.c.l.b16 %v650
  %v749 = vpack.c.b16 %v741, %v740
  %v750 = vpack.c.b16 %v743, %v742
  %v751 = vpack.c.b16 %v745, %v744
  %v752 = vpack.c.b16 %v747, %v746
  %v753 = vpack.c.b16 %v748, %v748
  %v759 = vsel %vm215, %v715, 0
  %v762 = vsel %vm215, %v716, 0
  %v765 = vsel %vm215, %v717, 0
  %v768 = vsel %vm215, %v718, 0
  %v771 = vsel %vm215, %v719, 0
  %v774 = vsel %vm215, %v720, 0
  %v777 = vsel %vm215, %v721, 0
  %v780 = vsel %vm215, %v722, 0
  %v783 = vsel %vm215, %v723, 0
  %v786 = vsel %vm215, %v724, 0
  %v789 = vsel %vm215, %v725, 0
  %v792 = vsel %vm215, %v726, 0
  %v795 = vsel %vm215, %v727, 0
  %v798 = vsel %vm215, %v728, 0
  %v801 = vsel %vm215, %v729, 0
  %v804 = vsel %vm215, %v730, 0
  %v807 = vsel %vm264, %v753, 0
  %809 = vmatpush.bf16.msra.mxu0 0
  %810 = vmatpush.bf16.msra.mxu0 0
  %811 = vmatpush.bf16.msra.mxu0 0
  %812 = vmatpush.bf16.msra.mxu0 %v807
  %813 = vmatpush.bf16.msra.mxu0 %v752
  %814 = vmatpush.bf16.msra.mxu0 %v751
  %815 = vmatpush.bf16.msra.mxu0 %v750
  %816 = vmatpush.bf16.msra.mxu0 %v749
  %817 = vmatmul.bf16.gmra.mxu0 %v759
  %v818 = vpop.f32.mrf.mxu0
  %v819 = vadd.f32 0.0, %v818
  %v820 = vpop.f32.mrf.mxu0
  %v821 = vadd.f32 0.0, %v820
  %822 = vmatmul.bf16.gmra.mxu0 %v762
  %v823 = vpop.f32.mrf.mxu0
  %v824 = vadd.f32 0.0, %v823
  %v825 = vpop.f32.mrf.mxu0
  %v826 = vadd.f32 0.0, %v825
  %827 = vmatmul.bf16.gmra.mxu0 %v765
  %v828 = vpop.f32.mrf.mxu0
  %v829 = vadd.f32 0.0, %v828
  %v830 = vpop.f32.mrf.mxu0
  %v831 = vadd.f32 0.0, %v830
  %832 = vmatmul.bf16.gmra.mxu0 %v768
  %v833 = vpop.f32.mrf.mxu0
  %v834 = vadd.f32 0.0, %v833
  %v835 = vpop.f32.mrf.mxu0
  %v836 = vadd.f32 0.0, %v835
  %837 = vmatmul.bf16.gmra.mxu0 %v771
  %v838 = vpop.f32.mrf.mxu0
  %v839 = vadd.f32 0.0, %v838
  %v840 = vpop.f32.mrf.mxu0
  %v841 = vadd.f32 0.0, %v840
  %842 = vmatmul.bf16.gmra.mxu0 %v774
  %v843 = vpop.f32.mrf.mxu0
  %v844 = vadd.f32 0.0, %v843
  %v845 = vpop.f32.mrf.mxu0
  %v846 = vadd.f32 0.0, %v845
  %847 = vmatmul.bf16.gmra.mxu0 %v777
  %v848 = vpop.f32.mrf.mxu0
  %v849 = vadd.f32 0.0, %v848
  %v850 = vpop.f32.mrf.mxu0
  %v851 = vadd.f32 0.0, %v850
  %852 = vmatmul.bf16.gmra.mxu0 %v780
  %v853 = vpop.f32.mrf.mxu0
  %v854 = vadd.f32 0.0, %v853
  %v855 = vpop.f32.mrf.mxu0
  %v856 = vadd.f32 0.0, %v855
  %857 = vmatmul.bf16.gmra.mxu0 %v783
  %v858 = vpop.f32.mrf.mxu0
  %v859 = vadd.f32 0.0, %v858
  %v860 = vpop.f32.mrf.mxu0
  %v861 = vadd.f32 0.0, %v860
  %862 = vmatmul.bf16.gmra.mxu0 %v786
  %v863 = vpop.f32.mrf.mxu0
  %v864 = vadd.f32 0.0, %v863
  %v865 = vpop.f32.mrf.mxu0
  %v866 = vadd.f32 0.0, %v865
  %867 = vmatmul.bf16.gmra.mxu0 %v789
  %v868 = vpop.f32.mrf.mxu0
  %v869 = vadd.f32 0.0, %v868
  %v870 = vpop.f32.mrf.mxu0
  %v871 = vadd.f32 0.0, %v870
  %872 = vmatmul.bf16.gmra.mxu0 %v792
  %v873 = vpop.f32.mrf.mxu0
  %v874 = vadd.f32 0.0, %v873
  %v875 = vpop.f32.mrf.mxu0
  %v876 = vadd.f32 0.0, %v875
  %877 = vmatmul.bf16.gmra.mxu0 %v795
  %v878 = vpop.f32.mrf.mxu0
  %v879 = vadd.f32 0.0, %v878
  %v880 = vpop.f32.mrf.mxu0
  %v881 = vadd.f32 0.0, %v880
  %882 = vmatmul.bf16.gmra.mxu0 %v798
  %v883 = vpop.f32.mrf.mxu0
  %v884 = vadd.f32 0.0, %v883
  %v885 = vpop.f32.mrf.mxu0
  %v886 = vadd.f32 0.0, %v885
  %887 = vmatmul.bf16.gmra.mxu0 %v801
  %v888 = vpop.f32.mrf.mxu0
  %v889 = vadd.f32 0.0, %v888
  %v890 = vpop.f32.mrf.mxu0
  %v891 = vadd.f32 0.0, %v890
  %892 = vmatmul.bf16.gmra.mxu0 %v804
  %v893 = vpop.f32.mrf.mxu0
  %v894 = vadd.f32 0.0, %v893
  %v895 = vpop.f32.mrf.mxu0
  %v896 = vadd.f32 0.0, %v895
  %897 = vdwg.mxu0
  %v898 = vadd.f32 %v525, %v819
  %v899 = vadd.f32 %v527, %v821
  %v900 = vadd.f32 %v530, %v824
  %v901 = vadd.f32 %v532, %v826
  %v902 = vadd.f32 %v535, %v829
  %v903 = vadd.f32 %v537, %v831
  %v904 = vadd.f32 %v540, %v834
  %v905 = vadd.f32 %v542, %v836
  %v906 = vadd.f32 %v545, %v839
  %v907 = vadd.f32 %v547, %v841
  %v908 = vadd.f32 %v550, %v844
  %v909 = vadd.f32 %v552, %v846
  %v910 = vadd.f32 %v555, %v849
  %v911 = vadd.f32 %v557, %v851
  %v912 = vadd.f32 %v560, %v854
  %v913 = vadd.f32 %v562, %v856
  %v914 = vadd.f32 %v565, %v859
  %v915 = vadd.f32 %v567, %v861
  %v916 = vadd.f32 %v570, %v864
  %v917 = vadd.f32 %v572, %v866
  %v918 = vadd.f32 %v575, %v869
  %v919 = vadd.f32 %v577, %v871
  %v920 = vadd.f32 %v580, %v874
  %v921 = vadd.f32 %v582, %v876
  %v922 = vadd.f32 %v585, %v879
  %v923 = vadd.f32 %v587, %v881
  %v924 = vadd.f32 %v590, %v884
  %v925 = vadd.f32 %v592, %v886
  %v926 = vadd.f32 %v595, %v889
  %v927 = vadd.f32 %v597, %v891
  %v928 = vadd.f32 %v600, %v894
  %v929 = vadd.f32 %v602, %v896
  %v930 = vld [vmem:[%s2] sm:$0x1]
  %v932 = vperm.slane %v930, 0
  %v934 = vadd.f32 %v898, %v932
  %v935 = vadd.f32 %v899, %v932
  %v936 = vadd.f32 %v900, %v932
  %v937 = vadd.f32 %v901, %v932
  %v938 = vadd.f32 %v902, %v932
  %v939 = vadd.f32 %v903, %v932
  %v940 = vadd.f32 %v904, %v932
  %v941 = vadd.f32 %v905, %v932
  %v942 = vadd.f32 %v906, %v932
  %v943 = vadd.f32 %v907, %v932
  %v944 = vadd.f32 %v908, %v932
  %v945 = vadd.f32 %v909, %v932
  %v946 = vadd.f32 %v910, %v932
  %v947 = vadd.f32 %v911, %v932
  %v948 = vadd.f32 %v912, %v932
  %v949 = vadd.f32 %v913, %v932
  %v950 = vadd.f32 %v914, %v932
  %v951 = vadd.f32 %v915, %v932
  %v952 = vadd.f32 %v916, %v932
  %v953 = vadd.f32 %v917, %v932
  %v954 = vadd.f32 %v918, %v932
  %v955 = vadd.f32 %v919, %v932
  %v956 = vadd.f32 %v920, %v932
  %v957 = vadd.f32 %v921, %v932
  %v958 = vadd.f32 %v922, %v932
  %v959 = vadd.f32 %v923, %v932
  %v960 = vadd.f32 %v924, %v932
  %v961 = vadd.f32 %v925, %v932
  %v962 = vadd.f32 %v926, %v932
  %v963 = vadd.f32 %v927, %v932
  %v964 = vadd.f32 %v928, %v932
  %v965 = vadd.f32 %v929, %v932
  %vm966 = vcmask 64512
  %967 = vst.msk [vmem:[%s3] sm:$0xff] %vm966, %v934
  %968 = vst.msk [vmem:[%s3 + $0x8] sm:$0xff] %vm966, %v935
  %969 = vst.msk [vmem:[%s3 + $0x10] sm:$0xff] %vm966, %v936
  %970 = vst.msk [vmem:[%s3 + $0x18] sm:$0xff] %vm966, %v937
  %971 = vst.msk [vmem:[%s3 + $0x20] sm:$0xff] %vm966, %v938
  %972 = vst.msk [vmem:[%s3 + $0x28] sm:$0xff] %vm966, %v939
  %973 = vst.msk [vmem:[%s3 + $0x30] sm:$0xff] %vm966, %v940
  %974 = vst.msk [vmem:[%s3 + $0x38] sm:$0xff] %vm966, %v941
  %975 = vst.msk [vmem:[%s3 + $0x40] sm:$0xff] %vm966, %v942
  %976 = vst.msk [vmem:[%s3 + $0x48] sm:$0xff] %vm966, %v943
  %977 = vst.msk [vmem:[%s3 + $0x50] sm:$0xff] %vm966, %v944
  %978 = vst.msk [vmem:[%s3 + $0x58] sm:$0xff] %vm966, %v945
  %979 = vst.msk [vmem:[%s3 + $0x60] sm:$0xff] %vm966, %v946
  %980 = vst.msk [vmem:[%s3 + $0x68] sm:$0xff] %vm966, %v947
  %981 = vst.msk [vmem:[%s3 + $0x70] sm:$0xff] %vm966, %v948
  %982 = vst.msk [vmem:[%s3 + $0x78] sm:$0xff] %vm966, %v949
  %983 = vst.msk [vmem:[%s3 + $0x80] sm:$0xff] %vm966, %v950
  %984 = vst.msk [vmem:[%s3 + $0x88] sm:$0xff] %vm966, %v951
  %985 = vst.msk [vmem:[%s3 + $0x90] sm:$0xff] %vm966, %v952
  %986 = vst.msk [vmem:[%s3 + $0x98] sm:$0xff] %vm966, %v953
  %987 = vst.msk [vmem:[%s3 + $0xa0] sm:$0xff] %vm966, %v954
  %988 = vst.msk [vmem:[%s3 + $0xa8] sm:$0xff] %vm966, %v955
  %989 = vst.msk [vmem:[%s3 + $0xb0] sm:$0xff] %vm966, %v956
  %990 = vst.msk [vmem:[%s3 + $0xb8] sm:$0xff] %vm966, %v957
  %991 = vst.msk [vmem:[%s3 + $0xc0] sm:$0xff] %vm966, %v958
  %992 = vst.msk [vmem:[%s3 + $0xc8] sm:$0xff] %vm966, %v959
  %993 = vst.msk [vmem:[%s3 + $0xd0] sm:$0xff] %vm966, %v960
  %994 = vst.msk [vmem:[%s3 + $0xd8] sm:$0xff] %vm966, %v961
  %995 = vst.msk [vmem:[%s3 + $0xe0] sm:$0xff] %vm966, %v962
  %996 = vst.msk [vmem:[%s3 + $0xe8] sm:$0xff] %vm966, %v963
  %997 = vst.msk [vmem:[%s3 + $0xf0] sm:$0xff] %vm966, %v964
  %998 = vst.msk [vmem:[%s3 + $0xf8] sm:$0xff] %vm966, %v965
  // Predicated region
  $region14: #{tpu_custom_call.1} parent=0 // pred_check
    _
  $region15: #{tpu_custom_call.1} parent=0 // pred_check_branch
    %1000 = sbr.rel (0) target = $region17
  $region16: #{tpu_custom_call.1} parent=0 // pred_region
    _
  $region17: #{tpu_custom_call.1} parent=0 // pred_fallthru
    _
  // Predicated region
  $region18: #{tpu_custom_call.1} parent=0 // pred_check
    _
  $region19: #{tpu_custom_call.1} parent=0 // pred_check_branch
    %1002 = sbr.rel (0) target = $region21
  $region20: #{tpu_custom_call.1} parent=0 // pred_region
    _
  $region21: #{tpu_custom_call.1} parent=0 // pred_fallthru
    _

</llo_original>
